<compile_context>
chip_gen: v7x
topology: tpu7x:2x2x1
jax: 0.10.0
libtpu: 0.0.40
codegen_flags: <defaults>
</compile_context>

<pallas_src>
import numpy as np
import jax
import jax.numpy as jnp
from jax.experimental import pallas as pl
from jax.experimental.pallas import tpu as pltpu

# ----------------------------- configuration ---------------------------------
BATCH = 2
DIM = 32                     # C
INPUT_RES = (8, 8)           # H, W
EPS = 1e-5                   # torch.nn.LayerNorm default

H, W = INPUT_RES
L = H * W
HH, WH = H // 2, W // 2
L_OUT = HH * WH              # merged tokens per image (16)
C4 = 4 * DIM                 # 128  -> exactly one vreg of lanes
C2 = 2 * DIM                 # 64


# ------------------------------ Pallas kernel ---------------------------------
def _patch_merging_kernel(x_ref, w_ref, b_ref, o_ref):
    # x_ref: (TOK, 4C) merged tokens, lane-dense (128 lanes).
    # w_ref: (4C, 2C) projection with LN gamma folded into its rows.
    # b_ref: (1, 2C)  LN beta folded through the projection (beta @ W^T).
    x = x_ref[...]                                            # f32 in this script
    mu = jnp.mean(x, axis=-1, keepdims=True)
    xc = x - mu
    var = jnp.mean(xc * xc, axis=-1, keepdims=True)           # biased var, eps inside rsqrt
    xhat = xc * jax.lax.rsqrt(var + EPS)
    out = jnp.dot(xhat, w_ref[...], preferred_element_type=jnp.float32) + b_ref[...]
    o_ref[...] = out.astype(o_ref.dtype)


def patch_merging(x, norm_w, norm_b, red_w):
    """x: (B, L, C); norm_w/norm_b: (4C,); red_w: (2C, 4C). Returns (B, L/4, 2C)."""
    b = x.shape[0]
    tok = b * L_OUT                                            # 32

    # 2x2 neighbourhood regroup into PyTorch channel order [x0, x1, x2, x3].
    # Pure layout op (reshape/transpose); not expressible as a BlockSpec index_map,
    # so it feeds the kernel as a lane-dense (tok, 4C) slab. allow_input_fusion
    # below lets XLA fuse this producer into the pallas_call input.
    xm = x.reshape(b, HH, 2, WH, 2, DIM).transpose(0, 1, 3, 4, 2, 5).reshape(tok, C4)

    # Fold LayerNorm affine into the projection (weight-side, constant-folded under jit).
    w_fold = norm_w[:, None] * red_w.T                         # (4C, 2C)
    bias = (norm_b @ red_w.T).reshape(1, C2)                   # (1, 2C)

    out = pl.pallas_call(
        _patch_merging_kernel,
        out_shape=jax.ShapeDtypeStruct((tok, C2), x.dtype),
        grid=(1,),                                             # whole problem in one step
        in_specs=[
            pl.BlockSpec((tok, C4), lambda i: (0, 0)),         # all merged tokens (32, 128)
            pl.BlockSpec((C4, C2), lambda i: (0, 0)),          # gamma-folded W^T
            pl.BlockSpec((1, C2), lambda i: (0, 0)),           # folded bias
        ],
        out_specs=pl.BlockSpec((tok, C2), lambda i: (0, 0)),
        compiler_params=pltpu.CompilerParams(
            dimension_semantics=("arbitrary",),
            allow_input_fusion=[True, False, False],           # fuse the regroup into input 0
        ),
    )(xm, w_fold, bias)
    return out.reshape(b, L_OUT, C2)


# --------------------------- pure-JAX reference --------------------------------
def reference_forward(x, norm_w, norm_b, red_w):
    b = x.shape[0]
    xr = x.reshape(b, H, W, DIM)
    x0 = xr[:, 0::2, 0::2, :]
    x1 = xr[:, 1::2, 0::2, :]
    x2 = xr[:, 0::2, 1::2, :]
    x3 = xr[:, 1::2, 1::2, :]
    cat = jnp.concatenate([x0, x1, x2, x3], axis=-1).reshape(b, L_OUT, C4)
    mu = cat.mean(-1, keepdims=True)
    var = ((cat - mu) ** 2).mean(-1, keepdims=True)
    y = (cat - mu) / jnp.sqrt(var + EPS) * norm_w + norm_b
    return y @ red_w.T


# ------------------------------------ main -------------------------------------
if __name__ == "__main__":
    key = jax.random.PRNGKey(0)
    kx, kg, kb, kw = jax.random.split(key, 4)
    x = jax.random.normal(kx, (BATCH, L, DIM), jnp.float32)
    norm_w = 1.0 + 0.1 * jax.random.normal(kg, (C4,), jnp.float32)
    norm_b = 0.1 * jax.random.normal(kb, (C4,), jnp.float32)
    red_w = 0.05 * jax.random.normal(kw, (C2, C4), jnp.float32)  # nn.Linear(4C, 2C, bias=False)

    out = jax.block_until_ready(patch_merging(x, norm_w, norm_b, red_w))
    ref = jax.block_until_ready(reference_forward(x, norm_w, norm_b, red_w))
    np.testing.assert_allclose(np.asarray(out), np.asarray(ref), rtol=1e-4, atol=1e-4)

    print("KERNEL_OK")
</pallas_src>

<mosaic_0001>
module attributes {stable_mosaic.version = 11 : i64} {
  func.func @_patch_merging_kernel(%arg0: i32, %arg1: memref<32x128xf32, #tpu.memory_space<vmem>>, %arg2: memref<128x64xf32, #tpu.memory_space<vmem>>, %arg3: memref<1x64xf32, #tpu.memory_space<vmem>>, %arg4: memref<32x64xf32, #tpu.memory_space<vmem>>) attributes {dimension_semantics = [#tpu.dimension_semantics<arbitrary>], iteration_bounds = array<i64: 1>, scalar_prefetch = 0 : i64, scratch_operands = 0 : i64, tpu.core_type = #tpu.core_type<tc>, window_params = [{pipeline_mode = #tpu.pipeline_mode<synchronous>, transform_indices = @transform_0, window_bounds = array<i64: 32, 128>}, {pipeline_mode = #tpu.pipeline_mode<synchronous>, transform_indices = @transform_1, window_bounds = array<i64: 128, 64>}, {pipeline_mode = #tpu.pipeline_mode<synchronous>, transform_indices = @transform_2, window_bounds = array<i64: 1, 64>}, {pipeline_mode = #tpu.pipeline_mode<synchronous>, transform_indices = @transform_3, window_bounds = array<i64: 32, 64>}]} {
    %c0 = arith.constant 0 : index
    %c0_0 = arith.constant 0 : index
    %0 = vector.load %arg1[%c0, %c0_0] : memref<32x128xf32, #tpu.memory_space<vmem>>, vector<32x128xf32>
    %cst = arith.constant dense<0.000000e+00> : vector<32xf32>
    %1 = vector.multi_reduction <add>, %0, %cst [1] : vector<32x128xf32> to vector<32xf32>
    %2 = vector.shape_cast %1 : vector<32xf32> to vector<32x1xf32>
    %cst_1 = arith.constant 1.280000e+02 : f32
    %3 = vector.broadcast %cst_1 : f32 to vector<32x1xf32>
    %4 = arith.divf %2, %3 : vector<32x1xf32>
    %5 = vector.broadcast %4 : vector<32x1xf32> to vector<32x128xf32>
    %6 = arith.subf %0, %5 : vector<32x128xf32>
    %7 = arith.mulf %6, %6 : vector<32x128xf32>
    %cst_2 = arith.constant dense<0.000000e+00> : vector<32xf32>
    %8 = vector.multi_reduction <add>, %7, %cst_2 [1] : vector<32x128xf32> to vector<32xf32>
    %9 = vector.shape_cast %8 : vector<32xf32> to vector<32x1xf32>
    %cst_3 = arith.constant 1.280000e+02 : f32
    %10 = vector.broadcast %cst_3 : f32 to vector<32x1xf32>
    %11 = arith.divf %9, %10 : vector<32x1xf32>
    %cst_4 = arith.constant 9.99999974E-6 : f32
    %12 = vector.broadcast %cst_4 : f32 to vector<32x1xf32>
    %13 = arith.addf %11, %12 : vector<32x1xf32>
    %14 = math.rsqrt %13 : vector<32x1xf32>
    %15 = vector.broadcast %14 : vector<32x1xf32> to vector<32x128xf32>
    %16 = arith.mulf %6, %15 : vector<32x128xf32>
    %c0_5 = arith.constant 0 : index
    %c0_6 = arith.constant 0 : index
    %17 = vector.load %arg2[%c0_5, %c0_6] : memref<128x64xf32, #tpu.memory_space<vmem>>, vector<128x64xf32>
    %cst_7 = arith.constant dense<0.000000e+00> : vector<32x64xf32>
    %18 = tpu.matmul %16, %17, %cst_7 {dimension_numbers = #tpu.dot_dimension_numbers<[1], [0], [0], [1], [0, 0, 1, 1], [], []>} : vector<32x128xf32>, vector<128x64xf32>, vector<32x64xf32> -> vector<32x64xf32>
    %c0_8 = arith.constant 0 : index
    %c0_9 = arith.constant 0 : index
    %19 = vector.load %arg3[%c0_8, %c0_9] : memref<1x64xf32, #tpu.memory_space<vmem>>, vector<1x64xf32>
    %20 = vector.broadcast %19 : vector<1x64xf32> to vector<32x64xf32>
    %21 = arith.addf %18, %20 : vector<32x64xf32>
    %c0_10 = arith.constant 0 : index
    %c0_11 = arith.constant 0 : index
    %22 = vector.load %arg4[%c0_10, %c0_11] : memref<32x64xf32, #tpu.memory_space<vmem>>, vector<32x64xf32>
    tpu.vector_store %arg4[%c0_10, %c0_11], %21 {strides = array<i32>} : memref<32x64xf32, #tpu.memory_space<vmem>>, vector<32x64xf32>,
    return
  }
  func.func @transform_0(%arg0: i32) -> (i32, i32) {
    %c0_i32 = arith.constant 0 : i32
    %c0_i32_0 = arith.constant 0 : i32
    %c0_i32_1 = arith.constant 0 : i32
    return %c0_i32, %c0_i32_0 : i32, i32
  }
  func.func @transform_1(%arg0: i32) -> (i32, i32) {
    %c0_i32 = arith.constant 0 : i32
    %c0_i32_0 = arith.constant 0 : i32
    %c0_i32_1 = arith.constant 0 : i32
    return %c0_i32, %c0_i32_0 : i32, i32
  }
  func.func @transform_2(%arg0: i32) -> (i32, i32) {
    %c0_i32 = arith.constant 0 : i32
    %c0_i32_0 = arith.constant 0 : i32
    %c0_i32_1 = arith.constant 0 : i32
    return %c0_i32, %c0_i32_0 : i32, i32
  }
  func.func @transform_3(%arg0: i32) -> (i32, i32) {
    %c0_i32 = arith.constant 0 : i32
    %c0_i32_0 = arith.constant 0 : i32
    %c0_i32_1 = arith.constant 0 : i32
    return %c0_i32, %c0_i32_0 : i32, i32
  }
}

</mosaic_0001>

<llo_original>
// kernel: tpu_custom_call.1
$region0: #{tpu_custom_call.1}
  #allocation0 [shape = 'u32[]', space=smem, size = 0x4, offset = 0x4, fixed_abs, tag = 'smem constant byte address 0x4 - core index']
  #allocation1 [shape = 'u32[144,128]{1,0:T(1,128)}', space=vmem, size = 0x12000, scoped, tag = 'internal scratch']
  %s0 = inlined_call_operand.vmem [shape: f32[32,128], index: 0, kind: input, shape index: {}]
  %s1 = inlined_call_operand.vmem [shape: f32[128,64], index: 1, kind: input, shape index: {}]
  %s2 = inlined_call_operand.vmem [shape: f32[1,64], index: 2, kind: input, shape index: {}]
  %s3 = inlined_call_operand.hbm [shape: f32[32,64], index: 3, kind: output, shape index: {}]
  %s4 = sld [smem:[#allocation0]]
  $region22: #{tpu_custom_call.1} parent=0
    _
  %s6 = ssub.s32 1, %s4
  %s7 = scalar_select 0, %s6, %s4
  $region1: #{tpu_custom_call.1} parent=0
    #allocation2 [shape = 'u8[16384]{0}', space=vmem, size = 0x4000, scoped, tag = 'output window, operand 0, single buffered']
    #allocation3 [shape = 's32[1]{0}', space=sflag, size = 0x4, scoped, tag = 'scoped memory for tpu_custom_call.1']
    %8 = vsyncpa [#allocation3], 0
    // Predicated region
    $region2: #{tpu_custom_call.1} parent=1 // pred_check
      _
    $region3: #{tpu_custom_call.1} parent=1 // pred_check_branch
      %10 = sbr.rel (0) target = $region5
    $region4: #{tpu_custom_call.1} parent=1 // pred_region
      _
    $region5: #{tpu_custom_call.1} parent=1 // pred_fallthru
      _
    // Predicated region
    $region6: #{tpu_custom_call.1} parent=1 // pred_check
      _
    $region7: #{tpu_custom_call.1} parent=1 // pred_check_branch
      %12 = sbr.rel (0) target = $region9
    $region8: #{tpu_custom_call.1} parent=1 // pred_region
      _
    $region9: #{tpu_custom_call.1} parent=1 // pred_fallthru
      _
    // Predicated region
    $region10: #{tpu_custom_call.1} parent=1 // pred_check
      _
    $region11: #{tpu_custom_call.1} parent=1 // pred_check_branch
      %14 = sbr.rel (0) target = $region13
    $region12: #{tpu_custom_call.1} parent=1 // pred_region
      _
    $region13: #{tpu_custom_call.1} parent=1 // pred_fallthru
      _
    %v15 = vld [vmem:[%s0] sm:$0xff]
    %v16 = vld [vmem:[%s0 + $0x8] sm:$0xff]
    %v17 = vld [vmem:[%s0 + $0x10] sm:$0xff]
    %v18 = vld [vmem:[%s0 + $0x18] sm:$0xff]
    %19 = vadd.xlane.f32.xlu0 %v15
    %v20 = vpop.xlane.xlu0 %19
    %21 = vadd.xlane.f32.xlu0 %v16
    %v22 = vpop.xlane.xlu0 %21
    %23 = vadd.xlane.f32.xlu0 %v17
    %v24 = vpop.xlane.xlu0 %23
    %25 = vadd.xlane.f32.xlu0 %v18
    %v26 = vpop.xlane.xlu0 %25
    %v27 = vrcp.pop 128.0
    %v28 = vmul.f32 %v20, %v27
    %v29 = vmul.f32 %v22, %v27
    %v30 = vmul.f32 %v24, %v27
    %v31 = vmul.f32 %v26, %v27
    %v32 = vsub.f32 %v15, %v28
    %v33 = vsub.f32 %v16, %v29
    %v34 = vsub.f32 %v17, %v30
    %v35 = vsub.f32 %v18, %v31
    %v36 = vmul.f32 %v32, %v32
    %v37 = vmul.f32 %v33, %v33
    %v38 = vmul.f32 %v34, %v34
    %v39 = vmul.f32 %v35, %v35
    %40 = vadd.xlane.f32.xlu0 %v36
    %v41 = vpop.xlane.xlu0 %40
    %42 = vadd.xlane.f32.xlu0 %v37
    %v43 = vpop.xlane.xlu0 %42
    %44 = vadd.xlane.f32.xlu0 %v38
    %v45 = vpop.xlane.xlu0 %44
    %46 = vadd.xlane.f32.xlu0 %v39
    %v47 = vpop.xlane.xlu0 %46
    %v48 = vmul.f32 %v41, %v27
    %v49 = vmul.f32 %v43, %v27
    %v50 = vmul.f32 %v45, %v27
    %v51 = vmul.f32 %v47, %v27
    %v52 = vadd.f32 %v48, 1e-05
    %v53 = vadd.f32 %v49, 1e-05
    %v54 = vadd.f32 %v50, 1e-05
    %v55 = vadd.f32 %v51, 1e-05
    %v56 = vrsqrt.pop %v52
    %v57 = vrsqrt.pop %v53
    %v58 = vrsqrt.pop %v54
    %v59 = vrsqrt.pop %v55
    %v60 = vmul.f32 %v32, %v56
    %v61 = vmul.f32 %v33, %v57
    %v62 = vmul.f32 %v34, %v58
    %v63 = vmul.f32 %v35, %v59
    %v64 = vld [vmem:[%s1] sm:$0xff]
    %v65 = vld [vmem:[%s1 + $0x8] sm:$0xff]
    %v66 = vld [vmem:[%s1 + $0x10] sm:$0xff]
    %v67 = vld [vmem:[%s1 + $0x18] sm:$0xff]
    %v68 = vld [vmem:[%s1 + $0x20] sm:$0xff]
    %v69 = vld [vmem:[%s1 + $0x28] sm:$0xff]
    %v70 = vld [vmem:[%s1 + $0x30] sm:$0xff]
    %v71 = vld [vmem:[%s1 + $0x38] sm:$0xff]
    %v72 = vld [vmem:[%s1 + $0x40] sm:$0xff]
    %v73 = vld [vmem:[%s1 + $0x48] sm:$0xff]
    %v74 = vld [vmem:[%s1 + $0x50] sm:$0xff]
    %v75 = vld [vmem:[%s1 + $0x58] sm:$0xff]
    %v76 = vld [vmem:[%s1 + $0x60] sm:$0xff]
    %v77 = vld [vmem:[%s1 + $0x68] sm:$0xff]
    %v78 = vld [vmem:[%s1 + $0x70] sm:$0xff]
    %v79 = vld [vmem:[%s1 + $0x78] sm:$0xff]
    %v80 = vld [vmem:[%s2] sm:$0x1]
    %v82 = vlaneseq
    %v83 = vshrl.u32 %v82, 7
    %v84 = vsub.s32 0, %v83
    %v85 = vrot.slane %v80, %v84
    %87 = vmatprep.subr.mxu0 0.0
    %88 = vmatpush1.msra.mxu0 %v64
    %89 = vmatprep.subr.mxu0 0.0
    %90 = vmatpush1.msra.mxu0 %v65
    %91 = vmatprep.subr.mxu0 0.0
    %92 = vmatpush1.msra.mxu0 %v66
    %93 = vmatprep.subr.mxu0 0.0
    %94 = vmatpush1.msra.mxu0 %v67
    %95 = vmatprep.subr.mxu0 0.0
    %96 = vmatpush1.msra.mxu0 %v68
    %97 = vmatprep.subr.mxu0 0.0
    %98 = vmatpush1.msra.mxu0 %v69
    %99 = vmatprep.subr.mxu0 0.0
    %100 = vmatpush1.msra.mxu0 %v70
    %101 = vmatprep.subr.mxu0 0.0
    %102 = vmatpush1.msra.mxu0 %v71
    %103 = vmatprep.subr.mxu0 0.0
    %104 = vmatpush1.msra.mxu0 %v72
    %105 = vmatprep.subr.mxu0 0.0
    %106 = vmatpush1.msra.mxu0 %v73
    %107 = vmatprep.subr.mxu0 0.0
    %108 = vmatpush1.msra.mxu0 %v74
    %109 = vmatprep.subr.mxu0 0.0
    %110 = vmatpush1.msra.mxu0 %v75
    %111 = vmatprep.subr.mxu0 0.0
    %112 = vmatpush1.msra.mxu0 %v76
    %113 = vmatprep.subr.mxu0 0.0
    %114 = vmatpush1.msra.mxu0 %v77
    %115 = vmatprep.subr.mxu0 0.0
    %116 = vmatpush1.msra.mxu0 %v78
    %117 = vmatprep.subr.mxu0 0.0
    %118 = vmatpush1.msra.mxu0 %v79
    %119 = vmatprep.subr.mxu0 0.0
    %120 = vmatpush1.msra.mxu0 0.0
    %121 = vmatprep.subr.mxu0 0.0
    %122 = vmatpush1.msra.mxu0 0.0
    %123 = vmatprep.subr.mxu0 0.0
    %124 = vmatpush1.msra.mxu0 0.0
    %125 = vmatprep.subr.mxu0 0.0
    %126 = vmatpush1.msra.mxu0 0.0
    %127 = vmatprep.subr.mxu0 0.0
    %128 = vmatpush1.msra.mxu0 0.0
    %129 = vmatprep.subr.mxu0 0.0
    %130 = vmatpush1.msra.mxu0 0.0
    %131 = vmatprep.subr.mxu0 0.0
    %132 = vmatpush1.msra.mxu0 0.0
    %133 = vmatprep.subr.mxu0 0.0
    %134 = vmatpush1.msra.mxu0 0.0
    %135 = vmatprep.subr.mxu0 0.0
    %136 = vmatpush1.msra.mxu0 0.0
    %137 = vmatprep.subr.mxu0 0.0
    %138 = vmatpush1.msra.mxu0 0.0
    %139 = vmatprep.subr.mxu0 0.0
    %140 = vmatpush1.msra.mxu0 0.0
    %141 = vmatprep.subr.mxu0 0.0
    %142 = vmatpush1.msra.mxu0 0.0
    %143 = vmatprep.subr.mxu0 0.0
    %144 = vmatpush1.msra.mxu0 0.0
    %145 = vmatprep.subr.mxu0 0.0
    %146 = vmatpush1.msra.mxu0 0.0
    %147 = vmatprep.subr.mxu0 0.0
    %148 = vmatpush1.msra.mxu0 0.0
    %149 = vmatprep.subr.mxu0 0.0
    %150 = vmatpush1.msra.mxu0 0.0
    %151 = vmatprep.mubr.f32.mxu0 0.0
    %152 = vmatmul.mubr.f32.gmra.mrb[0].mxu0 %v60
    %v153 = vpop.f32.mrb[0].mxu0
    %v154 = vadd.f32 %v85, %v153
    %v155 = vpop.f32.mrb[0].mxu0
    %156 = vmatprep.mubr.f32.mxu0 0.0
    %157 = vmatmul.mubr.f32.gmra.mrb[0].mxu0 %v61
    %v158 = vpop.f32.mrb[0].mxu0
    %v159 = vadd.f32 %v85, %v158
    %v160 = vpop.f32.mrb[0].mxu0
    %161 = vmatprep.mubr.f32.mxu0 0.0
    %162 = vmatmul.mubr.f32.gmra.mrb[0].mxu0 %v62
    %v163 = vpop.f32.mrb[0].mxu0
    %v164 = vadd.f32 %v85, %v163
    %v165 = vpop.f32.mrb[0].mxu0
    %166 = vmatprep.mubr.f32.mxu0 0.0
    %167 = vmatmul.mubr.f32.gmra.mrb[0].mxu0 %v63
    %v168 = vpop.f32.mrb[0].mxu0
    %v169 = vadd.f32 %v85, %v168
    %v170 = vpop.f32.mrb[0].mxu0
    %171 = vdwg.mxu0
    %vm172 = vcmask 523264
    %173 = vst.msk [vmem:[#allocation2] sm:$0xff] %vm172, %v154
    %174 = vst.msk [vmem:[#allocation2 + $0x8] sm:$0xff] %vm172, %v159
    %175 = vst.msk [vmem:[#allocation2 + $0x10] sm:$0xff] %vm172, %v164
    %176 = vst.msk [vmem:[#allocation2 + $0x18] sm:$0xff] %vm172, %v169
    // Predicated region
    $region14: #{tpu_custom_call.1} parent=1 // pred_check
      _
    $region15: #{tpu_custom_call.1} parent=1 // pred_check_branch
      %178 = sbr.rel (0) target = $region17
    $region16: #{tpu_custom_call.1} parent=1 // pred_region
      %s180 = ssub.s32 512, 512
      %181 = vsyncadd [#allocation3], %s180
      %s182 = sshll.u32 [#allocation2], 4
      %s183 = int_to_ptr.vmem [resolvable:$true] %s182
      %188 = dma.vmem_to_hbm [thread:$0]  %s183, 512, %s3, [#allocation3], 128, 128, 8
    $region17: #{tpu_custom_call.1} parent=1 // pred_fallthru
      _
    // Predicated region
    $region18: #{tpu_custom_call.1} parent=1 // pred_check
      _
    $region19: #{tpu_custom_call.1} parent=1 // pred_check_branch
      %190 = sbr.rel (0) target = $region21
    $region20: #{tpu_custom_call.1} parent=1 // pred_region
      %191 = dma.done [#allocation3], 512
    $region21: #{tpu_custom_call.1} parent=1 // pred_fallthru
      _
    %192 = vsyncpa [#allocation3], 1

</llo_original>
